<compile_context>
chip_gen: v7x
topology: tpu7x:2x2x1
jax: 0.10.0
libtpu: 0.0.40
codegen_flags: <defaults>
</compile_context>

<pallas_src>
import math

import jax
import jax.numpy as jnp
import numpy as np
from jax.experimental import pallas as pl
from jax.experimental.pallas import tpu as pltpu


def _round_up(x, m):
    return ((x + m - 1) // m) * m


# ----------------------------- Pallas kernel ------------------------------- #

def fourier_matmul_kernel(basis_ref, coef_ref, out_ref, acc_ref):
    """One (batch, time-tile, freq-tile) grid step of out[b] = basis @ coef[b].

    basis_ref: (tile_t, tile_f)      packed [cos | sin] basis tile
    coef_ref : (1, tile_f, d_pad)    packed [2*Re/t ; -2*Im/t] coefficient tile
    out_ref  : (1, tile_t, d_pad)    output time tile (lane-dense, d_pad % 128 == 0)
    acc_ref  : (tile_t, d_pad) f32   accumulator carried across the f grid axis
    """
    @pl.when(pl.program_id(2) == 0)
    def _init():
        acc_ref[...] = jnp.zeros_like(acc_ref)

    acc_ref[...] += jnp.dot(basis_ref[...], coef_ref[0],
                            preferred_element_type=jnp.float32)

    @pl.when(pl.program_id(2) == pl.num_programs(2) - 1)
    def _store():
        out_ref[0] = acc_ref[...].astype(out_ref.dtype)


# --------------------------------- Forward --------------------------------- #
# TODO(synk): complex rfft and per-(batch,channel) top-k have no clean Pallas
# equivalent; they are cheap preprocessing and stay in XLA.

def fourier_layer_forward(x, pred_len, k=None, low_freq=1, output_attention=False):
    """x: (b, t, d). Returns (x_reconstructed (b, t+pred_len, d), attn-or-None)."""
    b, t, d = x.shape
    t_out = t + pred_len

    # ----- k_ selection (mirrors the PyTorch module) -----
    if k is None or k >= t // 2:
        k_ = t // 2 - low_freq - 1 if t % 2 == 0 else t // 2 - low_freq
        k_ = max(1, k_)
    else:
        k_ = k

    # ----- XLA preprocessing: rfft, top-k mask, dense coefficient scatter -----
    x_freq = jnp.fft.rfft(x, axis=1)                            # (b, F, d) complex
    hi_end = x_freq.shape[1] - 1 if t % 2 == 0 else x_freq.shape[1]
    n_high = hi_end - low_freq
    k_ = min(k_, n_high)
    if k_ <= 0 or n_high <= 0:
        return jnp.zeros((b, t_out, d), x.dtype), None

    x_freq_high = x_freq[:, low_freq:hi_end]                    # (b, n_high, d)
    mags = jnp.abs(x_freq_high)                                 # (b, n_high, d)
    values, idx = jax.lax.top_k(jnp.moveaxis(mags, 1, 2), k_)   # (b, d, k_)
    season_attn = jnp.moveaxis(values, 2, 1)                    # (b, k_, d) like torch.topk

    # boolean keep-mask over the n_high bins, per (b, d)
    keep = (idx[..., None] == jnp.arange(n_high)[None, None, None, :]).any(axis=2)
    keep = jnp.moveaxis(keep, 1, 2)                             # (b, n_high, d)

    # 2*amp*cos(theta + phase) = (2/t)*Re(X)*cos(theta) - (2/t)*Im(X)*sin(theta)
    a_coef = jnp.where(keep, jnp.real(x_freq_high), 0.0) * (2.0 / t)
    b_coef = jnp.where(keep, jnp.imag(x_freq_high), 0.0) * (-2.0 / t)
    coef = jnp.concatenate([a_coef, b_coef], axis=1).astype(jnp.float32)  # (b, 2*n_high, d)

    # cos/sin basis over the absolute extrapolation horizon (f32, computed once)
    tau = jnp.arange(t_out, dtype=jnp.float32)
    fvals = (low_freq + jnp.arange(n_high, dtype=jnp.float32)) / t        # == rfftfreq bins
    theta = (2.0 * math.pi) * tau[:, None] * fvals[None, :]               # (t_out, n_high)
    basis = jnp.concatenate([jnp.cos(theta), jnp.sin(theta)], axis=1)
    basis = basis.astype(jnp.float32)                                     # (t_out, 2*n_high)

    # ----- Pad to MXU-aligned, lane-dense tiles -----
    d_pad = _round_up(d, 128)                 # lane-dense stores
    f2 = 2 * n_high
    f2_pad = _round_up(f2, 128)               # aligned contraction dim (zeros contribute 0)
    tile_t = _round_up(t_out, 8) if t_out <= 512 else 256
    t_out_pad = _round_up(t_out, tile_t)
    tile_f = min(512, f2_pad)

    basis_p = jnp.zeros((t_out_pad, f2_pad), jnp.float32).at[:t_out, :f2].set(basis)
    coef_p = jnp.zeros((b, f2_pad, d_pad), jnp.float32).at[:, :f2, :d].set(coef)

    grid = (b, t_out_pad // tile_t, f2_pad // tile_f)

    # modest, explicit VMEM budget (tiles are tiny; safe on v5e/v6e/v7x)
    vmem_needed = 4 * (2 * tile_t * tile_f + 2 * tile_f * d_pad
                       + 2 * tile_t * d_pad + tile_t * d_pad)
    vmem_limit = min(max(2 * vmem_needed, 16 * 1024 * 1024), 32 * 1024 * 1024)

    cost = pl.CostEstimate(
        flops=2 * b * t_out_pad * f2_pad * d_pad,
        transcendentals=0,
        bytes_accessed=4 * (t_out_pad * f2_pad + b * f2_pad * d_pad
                            + b * t_out_pad * d_pad))

    recon = pl.pallas_call(
        fourier_matmul_kernel,
        out_shape=jax.ShapeDtypeStruct((b, t_out_pad, d_pad), x.dtype),
        grid_spec=pltpu.PrefetchScalarGridSpec(
            num_scalar_prefetch=0,
            grid=grid,
            in_specs=[
                pl.BlockSpec((tile_t, tile_f), lambda bi, ti, fi: (ti, fi)),
                pl.BlockSpec((1, tile_f, d_pad), lambda bi, ti, fi: (bi, fi, 0)),
            ],
            out_specs=pl.BlockSpec((1, tile_t, d_pad), lambda bi, ti, fi: (bi, ti, 0)),
            scratch_shapes=[pltpu.VMEM((tile_t, d_pad), jnp.float32)],
        ),
        compiler_params=pltpu.CompilerParams(
            dimension_semantics=("parallel", "parallel", "arbitrary"),
            vmem_limit_bytes=vmem_limit),
        cost_estimate=cost,
    )(basis_p, coef_p)

    recon = recon[:, :t_out, :d]
    return recon, (season_attn if output_attention else None)


# ----------------------------- Pure-JAX reference --------------------------- #

def fourier_layer_reference(x, pred_len, k=None, low_freq=1):
    """Mirrors the PyTorch forward (explicit top-k gather + conjugate pair)."""
    b, t, d = x.shape
    if k is None or k >= t // 2:
        k_ = t // 2 - low_freq - 1 if t % 2 == 0 else t // 2 - low_freq
        k_ = max(1, k_)
    else:
        k_ = k

    x_freq = jnp.fft.rfft(x, axis=1)
    hi_end = x_freq.shape[1] - 1 if t % 2 == 0 else x_freq.shape[1]
    n_high = hi_end - low_freq
    k_ = min(k_, n_high)
    if k_ <= 0:
        return jnp.zeros((b, t + pred_len, d), x.dtype), None

    x_freq_high = x_freq[:, low_freq:hi_end]
    mags = jnp.abs(x_freq_high)
    _, idx = jax.lax.top_k(jnp.moveaxis(mags, 1, 2), k_)               # (b, d, k_)
    idx_in_x_freq = jnp.moveaxis(idx, 2, 1) + low_freq                 # (b, k_, d)

    x_freq_topk = jnp.take_along_axis(x_freq, idx_in_x_freq, axis=1)   # (b, k_, d)
    all_freqs = jnp.fft.rfftfreq(t).astype(jnp.float32)
    topk_freqs = all_freqs[idx_in_x_freq]

    amp = jnp.abs(x_freq_topk) / t
    phase = jnp.angle(x_freq_topk)

    amp_ex = jnp.concatenate([amp, amp], axis=1)
    phase_ex = jnp.concatenate([phase, -phase], axis=1)
    f_ex = jnp.concatenate([topk_freqs, -topk_freqs], axis=1)

    t_val = jnp.arange(t + pred_len, dtype=jnp.float32)[None, None, :, None]
    x_time = amp_ex[:, :, None, :] * jnp.cos(
        2.0 * math.pi * f_ex[:, :, None, :] * t_val + phase_ex[:, :, None, :])
    return jnp.sum(x_time, axis=1), None


# ----------------------------------- Main ----------------------------------- #

if __name__ == "__main__":
    # small shapes consistent with the module: (batch, seq, d_model)
    b, t, d = 2, 16, 32
    pred_len = 8
    low_freq = 1

    key = jax.random.PRNGKey(0)
    x = jax.random.normal(key, (b, t, d), jnp.float32)

    recon, attn = fourier_layer_forward(x, pred_len, k=None, low_freq=low_freq)
    jax.block_until_ready(recon)

    recon_ref, _ = fourier_layer_reference(x, pred_len, k=None, low_freq=low_freq)
    assert recon.shape == (b, t + pred_len, d)
    assert recon.dtype == x.dtype
    np.testing.assert_allclose(np.asarray(recon), np.asarray(recon_ref),
                               rtol=2e-3, atol=2e-3)

    print("KERNEL_OK")
</pallas_src>

<mosaic_0001>
module attributes {stable_mosaic.version = 11 : i64} {
  func.func @fourier_matmul_kernel(%arg0: i32, %arg1: i32, %arg2: i32, %arg3: memref<24x128xf32, #tpu.memory_space<vmem>>, %arg4: memref<1x128x128xf32, #tpu.memory_space<vmem>>, %arg5: memref<1x24x128xf32, #tpu.memory_space<vmem>>, %arg6: memref<24x128xf32, #tpu.memory_space<vmem>>) attributes {dimension_semantics = [#tpu.dimension_semantics<parallel>, #tpu.dimension_semantics<parallel>, #tpu.dimension_semantics<arbitrary>], iteration_bounds = array<i64: 2, 1, 1>, scalar_prefetch = 0 : i64, scratch_operands = 1 : i64, tpu.core_type = #tpu.core_type<tc>, window_params = [{transform_indices = @transform_0, window_bounds = array<i64: 24, 128>}, {transform_indices = @transform_1, window_bounds = array<i64: 1, 128, 128>}, {transform_indices = @transform_2, window_bounds = array<i64: 1, 24, 128>}]} {
    %c0_i32 = arith.constant 0 : i32
    %0 = arith.cmpi eq, %arg2, %c0_i32 : i32
    %1 = arith.extui %0 : i1 to i32
    %c0_i32_0 = arith.constant 0 : i32
    %2 = arith.cmpi ne, %1, %c0_i32_0 : i32
    scf.if %2 {
      %cst_11 = arith.constant 0.000000e+00 : f32
      %13 = vector.broadcast %cst_11 : f32 to vector<24x128xf32>
      %c0_12 = arith.constant 0 : index
      %c0_13 = arith.constant 0 : index
      %14 = vector.load %arg6[%c0_12, %c0_13] : memref<24x128xf32, #tpu.memory_space<vmem>>, vector<24x128xf32>
      tpu.vector_store %arg6[%c0_12, %c0_13], %13 {strides = array<i32>} : memref<24x128xf32, #tpu.memory_space<vmem>>, vector<24x128xf32>,
    } else {
    }
    %c0 = arith.constant 0 : index
    %c0_1 = arith.constant 0 : index
    %3 = vector.load %arg6[%c0, %c0_1] : memref<24x128xf32, #tpu.memory_space<vmem>>, vector<24x128xf32>
    %c0_2 = arith.constant 0 : index
    %c0_3 = arith.constant 0 : index
    %4 = vector.load %arg3[%c0_2, %c0_3] : memref<24x128xf32, #tpu.memory_space<vmem>>, vector<24x128xf32>
    %c0_4 = arith.constant 0 : index
    %c0_5 = arith.constant 0 : index
    %c0_6 = arith.constant 0 : index
    %5 = vector.load %arg4[%c0_4, %c0_5, %c0_6] : memref<1x128x128xf32, #tpu.memory_space<vmem>>, vector<1x128x128xf32>
    %6 = vector.shape_cast %5 : vector<1x128x128xf32> to vector<128x128xf32>
    %cst = arith.constant dense<0.000000e+00> : vector<24x128xf32>
    %7 = tpu.matmul %4, %6, %cst {dimension_numbers = #tpu.dot_dimension_numbers<[1], [0], [0], [1], [0, 0, 1, 1], [], []>} : vector<24x128xf32>, vector<128x128xf32>, vector<24x128xf32> -> vector<24x128xf32>
    %8 = arith.addf %3, %7 : vector<24x128xf32>
    %c0_7 = arith.constant 0 : index
    %c0_8 = arith.constant 0 : index
    %9 = vector.load %arg6[%c0_7, %c0_8] : memref<24x128xf32, #tpu.memory_space<vmem>>, vector<24x128xf32>
    tpu.vector_store %arg6[%c0_7, %c0_8], %8 {strides = array<i32>} : memref<24x128xf32, #tpu.memory_space<vmem>>, vector<24x128xf32>,
    %c0_i32_9 = arith.constant 0 : i32
    %10 = arith.cmpi eq, %arg2, %c0_i32_9 : i32
    %11 = arith.extui %10 : i1 to i32
    %c0_i32_10 = arith.constant 0 : i32
    %12 = arith.cmpi ne, %11, %c0_i32_10 : i32
    scf.if %12 {
      %c0_11 = arith.constant 0 : index
      %c0_12 = arith.constant 0 : index
      %13 = vector.load %arg6[%c0_11, %c0_12] : memref<24x128xf32, #tpu.memory_space<vmem>>, vector<24x128xf32>
      %c0_13 = arith.constant 0 : index
      %c0_14 = arith.constant 0 : index
      %c0_15 = arith.constant 0 : index
      %14 = vector.load %arg5[%c0_13, %c0_14, %c0_15] : memref<1x24x128xf32, #tpu.memory_space<vmem>>, vector<1x24x128xf32>
      %15 = vector.shape_cast %14 : vector<1x24x128xf32> to vector<24x128xf32>
      %16 = vector.shape_cast %13 : vector<24x128xf32> to vector<1x24x128xf32>
      tpu.vector_store %arg5[%c0_13, %c0_14, %c0_15], %16 {strides = array<i32>} : memref<1x24x128xf32, #tpu.memory_space<vmem>>, vector<1x24x128xf32>,
    } else {
    }
    return
  }
  func.func @transform_0(%arg0: i32, %arg1: i32, %arg2: i32) -> (i32, i32) {
    %c0_i32 = arith.constant 0 : i32
    return %arg1, %arg2 : i32, i32
  }
  func.func @transform_1(%arg0: i32, %arg1: i32, %arg2: i32) -> (i32, i32, i32) {
    %c0_i32 = arith.constant 0 : i32
    %c0_i32_0 = arith.constant 0 : i32
    return %arg0, %arg2, %c0_i32 : i32, i32, i32
  }
  func.func @transform_2(%arg0: i32, %arg1: i32, %arg2: i32) -> (i32, i32, i32) {
    %c0_i32 = arith.constant 0 : i32
    %c0_i32_0 = arith.constant 0 : i32
    return %arg0, %arg1, %c0_i32 : i32, i32, i32
  }
}

</mosaic_0001>

<llo_original>
// kernel: tpu_custom_call.1
$region0: #{tpu_custom_call.1}
  #allocation0 [shape = 'u32[]', space=smem, size = 0x4, offset = 0x4, fixed_abs, tag = 'smem constant byte address 0x4 - core index']
  #allocation1 [shape = 'u32[144,128]{1,0:T(1,128)}', space=vmem, size = 0x12000, scoped, tag = 'internal scratch']
  #allocation2 [shape = 'f32[24,128]{1,0:T(8,128)}', space=vmem, size = 0x3000, scoped, tag = 'scratch operand']
  %s0 = inlined_call_operand.hbm [shape: f32[24,128], index: 0, kind: input, shape index: {}]
  %s1 = inlined_call_operand.hbm [shape: f32[2,128,128], index: 1, kind: input, shape index: {}]
  %s2 = inlined_call_operand.hbm [shape: f32[2,24,128], index: 2, kind: output, shape index: {}]
  %s3 = sld [smem:[#allocation0]]
  $region57: #{tpu_custom_call.1} parent=0
    _
  %s5 = ssub.s32 1, %s3
  %s6 = scalar_select 0, %s5, %s3
  $region1: #{tpu_custom_call.1} parent=0
    #allocation3 [shape = 'u8[12288]{0}', space=vmem, size = 0x3000, scoped, tag = 'input window, operand 0, single buffered']
    #allocation4 [shape = 's32[2]{0}', space=sflag, size = 0x8, scoped, tag = 'scoped memory for tpu_custom_call.1']
    #allocation5 [shape = 's32[2]{0}', space=sflag, size = 0x8, scoped, tag = 'scoped memory for tpu_custom_call.1']
    #allocation6 [shape = 'u8[131072]{0}', space=vmem, size = 0x20000, scoped, tag = 'input window, operand 1']
    #allocation7 [shape = 's32[2]{0}', space=sflag, size = 0x8, scoped, tag = 'scoped memory for tpu_custom_call.1']
    #allocation8 [shape = 'u8[24576]{0}', space=vmem, size = 0x6000, scoped, tag = 'output window, operand 0']
    %7 = vsyncpa [#allocation4], 0
    %8 = vsyncpa [#allocation7], 0
    %s9 = scalar_lea.sflag [#allocation7], 1
    %10 = vsyncpa %s9, 0
    %11 = vsyncpa [#allocation5], 0
    %s12 = scalar_lea.sflag [#allocation5], 1
    %13 = vsyncpa %s12, 0
    loop: start=0, step=1, limit=4
    $region2: #{tpu_custom_call.1} parent=1 // loop_pre_header
      _
    $region3: #{tpu_custom_call.1} parent=1 // loop_header
      %s15 = sphi 0, %s19
      %p16 = scmp.ge.s32.totalorder %s15, 4
      %s22 = sphi 0, %s41
      %s23 = sphi 0, %s37
      %s24 = sphi 0, %s33
      %s25 = sphi 0, %s22
      %s26 = sphi 0, %s23
      %s27 = sphi 0, %s24
      %s28 = sphi 0, %s25
      %s29 = sphi 0, %s26
      %s30 = sphi 0, %s27
      %s46 = sphi 0, %s48
      %s49 = sphi 0, %s46
      %s50 = sphi 0, %s49
      %s66 = sphi 0, %s50
      %s74 = sphi 0, %s76
      %s77 = sphi 0, %s74
      %s78 = sphi 0, %s77
      %s94 = sphi 0, %s78
      %s102 = sphi 0, %s104
      %s105 = sphi 0, %s102
      %s106 = sphi 0, %s105
      %s122 = sphi 0, %s106
    $region4: #{tpu_custom_call.1} parent=1 // loop_header_branch
      %18 = sbr.rel (%p16) target = $region8
    $region5: #{tpu_custom_call.1} parent=1 // loop_body
      %s20 = ssub.s32 %s15, 1
      %s21 = ssub.s32 %s15, 2
      %s31 = sadd.s32 1, %s24
      %p32 = scmp.ge.s32.totalorder %s31, 1
      %s33 = scalar_select %p32, 0, %s31
      %s34 = sadd.s32 1, %s23
      %s35 = scalar_select %p32, %s34, %s23
      %p36 = scmp.ge.s32.totalorder %s35, 1
      %s37 = scalar_select %p36, 0, %s35
      %s38 = sadd.s32 1, %s22
      %s39 = scalar_select %p36, %s38, %s22
      %p40 = scmp.ge.s32.totalorder %s39, 2
      %s41 = scalar_select %p40, 0, %s39
      %s42 = ssub.s32 %s23, %s37
      %s43 = ssub.s32 %s24, %s33
      %s44 = sor.u32 %s42, %s43
      %p45 = scmp.eq.s32.totalorder %s44, 0
      %s47 = sadd.s32 %s46, 1
      %s48 = scalar_select %p45, %s46, %s47
      %p51 = pneg %p45
      %p52 = scmp.eq.s32.totalorder %s15, 1
      %p53 = por %p51, %p52
      %p54 = scmp.ne.s32.totalorder %s46, %s49
      %p55 = scmp.eq.s32.totalorder %s15, 0
      %p56 = por %p54, %p55
      %p57 = scmp.ne.s32.totalorder %s46, %s49
      %p58 = scmp.eq.s32.totalorder %s20, 1
      %p59 = por %p57, %p58
      %p60 = scmp.ne.s32.totalorder %s49, %s50
      %p61 = scmp.eq.s32.totalorder %s20, 0
      %p62 = por %p60, %p61
      %p63 = scmp.ne.s32.totalorder %s49, %s50
      %p64 = scmp.eq.s32.totalorder %s21, 1
      %p65 = por %p63, %p64
      %p67 = scmp.ne.s32.totalorder %s50, %s66
      %p68 = scmp.eq.s32.totalorder %s21, 0
      %p69 = por %p67, %p68
      %s70 = ssub.s32 %s22, %s41
      %s71 = ssub.s32 %s24, %s33
      %s72 = sor.u32 %s70, %s71
      %p73 = scmp.eq.s32.totalorder %s72, 0
      %s75 = sadd.s32 %s74, 1
      %s76 = scalar_select %p73, %s74, %s75
      %p79 = pneg %p73
      %p80 = scmp.eq.s32.totalorder %s15, 1
      %p81 = por %p79, %p80
      %p82 = scmp.ne.s32.totalorder %s74, %s77
      %p83 = scmp.eq.s32.totalorder %s15, 0
      %p84 = por %p82, %p83
      %p85 = scmp.ne.s32.totalorder %s74, %s77
      %p86 = scmp.eq.s32.totalorder %s20, 1
      %p87 = por %p85, %p86
      %p88 = scmp.ne.s32.totalorder %s77, %s78
      %p89 = scmp.eq.s32.totalorder %s20, 0
      %p90 = por %p88, %p89
      %p91 = scmp.ne.s32.totalorder %s77, %s78
      %p92 = scmp.eq.s32.totalorder %s21, 1
      %p93 = por %p91, %p92
      %p95 = scmp.ne.s32.totalorder %s78, %s94
      %p96 = scmp.eq.s32.totalorder %s21, 0
      %p97 = por %p95, %p96
      %s98 = ssub.s32 %s22, %s41
      %s99 = ssub.s32 %s23, %s37
      %s100 = sor.u32 %s98, %s99
      %p101 = scmp.eq.s32.totalorder %s100, 0
      %s103 = sadd.s32 %s102, 1
      %s104 = scalar_select %p101, %s102, %s103
      %p107 = pneg %p101
      %p108 = scmp.eq.s32.totalorder %s15, 1
      %p109 = por %p107, %p108
      %p110 = scmp.ne.s32.totalorder %s102, %s105
      %p111 = scmp.eq.s32.totalorder %s15, 0
      %p112 = por %p110, %p111
      %p113 = scmp.ne.s32.totalorder %s102, %s105
      %p114 = scmp.eq.s32.totalorder %s20, 1
      %p115 = por %p113, %p114
      %p116 = scmp.ne.s32.totalorder %s105, %s106
      %p117 = scmp.eq.s32.totalorder %s20, 0
      %p118 = por %p116, %p117
      %p119 = scmp.ne.s32.totalorder %s105, %s106
      %p120 = scmp.eq.s32.totalorder %s21, 1
      %p121 = por %p119, %p120
      %p123 = scmp.ne.s32.totalorder %s106, %s122
      %p124 = scmp.eq.s32.totalorder %s21, 0
      %p125 = por %p123, %p124
      %p126 = scmp.le.s32.totalorder 1, %s15
      %p127 = scmp.lt.s32.totalorder %s15, 3
      %p128 = pnand %p126, %p127
      %p129 = pneg %p128
      // Predicated region
      $region9: #{tpu_custom_call.1} parent=5 // pred_check
        _
      $region10: #{tpu_custom_call.1} parent=5 // pred_check_branch
        %131 = sbr.rel (%p128) target = $region12
      $region11: #{tpu_custom_call.1} parent=5 // pred_region
        %s132 = ssub.s32 %s15, 1
        // Predicated region
        $region13: #{tpu_custom_call.1} parent=11 // pred_check
          %p133 = pneg %p62
        $region14: #{tpu_custom_call.1} parent=11 // pred_check_branch
          %135 = sbr.rel (%p133) target = $region16
        $region15: #{tpu_custom_call.1} parent=11 // pred_region
          %s136 = smul.u32 3, %s26
          %s138 = ssub.s32 384, 384
          %139 = vsyncadd [#allocation4], %s138
          %s140 = sadd.s32 %s27, %s136
          %s141 = smul.addr %s140, 128
          %s142 = scalar_lea.hbm %s0, %s141
          %s143 = sshll.u32 [#allocation3], 4
          %s144 = int_to_ptr.vmem [resolvable:$true] %s143
          %149 = dma.hbm_to_vmem [thread:$0]  %s142, 384, %s144, [#allocation4], 128, 128, 8
        $region16: #{tpu_custom_call.1} parent=11 // pred_fallthru
          _
      $region12: #{tpu_custom_call.1} parent=5 // pred_fallthru
        _
      %p150 = scmp.lt.s32.totalorder %s15, 2
      // Predicated region
      $region17: #{tpu_custom_call.1} parent=5 // pred_check
        %p151 = pneg %p150
      $region18: #{tpu_custom_call.1} parent=5 // pred_check_branch
        %153 = sbr.rel (%p151) target = $region20
      $region19: #{tpu_custom_call.1} parent=5 // pred_region
        // Predicated region
        $region21: #{tpu_custom_call.1} parent=19 // pred_check
          %p154 = pneg %p84
        $region22: #{tpu_custom_call.1} parent=19 // pred_check_branch
          %156 = sbr.rel (%p154) target = $region24
        $region23: #{tpu_custom_call.1} parent=19 // pred_region
          %s157 = sand.u32 %s74, 1
          %s158 = scalar_lea.sflag [#allocation7], %s157
          %s159 = sand.u32 %s74, 1
          %s160 = smul.addr %s159, 128
          %s161 = scalar_lea.vmem [#allocation6], %s160
          %s162 = smul.u32 16, %s24
          %s164 = ssub.s32 2048, 2048
          %165 = vsyncadd %s158, %s164
          %s166 = smul.addr %s22, 16
          %s167 = sadd.s32 %s162, %s166
          %s168 = smul.addr %s167, 128
          %s169 = scalar_lea.hbm %s1, %s168
          %s170 = sshll.u32 %s161, 4
          %s171 = int_to_ptr.vmem [resolvable:$true] %s170
          %176 = dma.hbm_to_vmem [thread:$0]  %s169, 2048, %s171, %s158, 128, 128, 8
        $region24: #{tpu_custom_call.1} parent=19 // pred_fallthru
          _
      $region20: #{tpu_custom_call.1} parent=5 // pred_fallthru
        _
      %p177 = scmp.le.s32.totalorder 1, %s15
      %p178 = scmp.lt.s32.totalorder %s15, 3
      %p179 = pnand %p177, %p178
      %p180 = pneg %p179
      // Predicated region
      $region25: #{tpu_custom_call.1} parent=5 // pred_check
        _
      $region26: #{tpu_custom_call.1} parent=5 // pred_check_branch
        %182 = sbr.rel (%p179) target = $region28
      $region27: #{tpu_custom_call.1} parent=5 // pred_region
        %s183 = ssub.s32 %s15, 1
        // Predicated region
        $region29: #{tpu_custom_call.1} parent=27 // pred_check
          %p184 = pneg %p62
        $region30: #{tpu_custom_call.1} parent=27 // pred_check_branch
          %186 = sbr.rel (%p184) target = $region32
        $region31: #{tpu_custom_call.1} parent=27 // pred_region
          %187 = dma.done [#allocation4], 384
        $region32: #{tpu_custom_call.1} parent=27 // pred_fallthru
          _
        %s188 = sand.u32 %s77, 1
        %s189 = scalar_lea.sflag [#allocation7], %s188
        %s190 = sand.u32 %s77, 1
        %s191 = smul.addr %s190, 128
        %s192 = scalar_lea.vmem [#allocation6], %s191
        // Predicated region
        $region33: #{tpu_custom_call.1} parent=27 // pred_check
          %p193 = pneg %p90
        $region34: #{tpu_custom_call.1} parent=27 // pred_check_branch
          %195 = sbr.rel (%p193) target = $region36
        $region35: #{tpu_custom_call.1} parent=27 // pred_region
          %196 = dma.done %s189, 2048
        $region36: #{tpu_custom_call.1} parent=27 // pred_fallthru
          _
        %p197 = pneg %p62
        %p198 = pneg %p59
        %s199 = sand.u32 %s77, 1
        %s200 = scalar_lea.sflag [#allocation7], %s199
        %s201 = sand.u32 %s77, 1
        %s202 = smul.addr %s201, 128
        %s203 = scalar_lea.vmem [#allocation6], %s202
        %p204 = pneg %p90
        %p205 = pneg %p87
        %p206 = pneg %p118
        %p207 = pneg %p115
        %s208 = sand.u32 %s105, 1
        %s209 = scalar_lea.sflag [#allocation5], %s208
        %s210 = sand.u32 %s105, 1
        %s211 = smul.addr %s210, 24
        %s212 = scalar_lea.vmem [#allocation8], %s211
        %s213 = smul.u32 3, %s26
        %s214 = smul.u32 16, %s27
        %s215 = smul.u32 3, %s26
        %p216 = scmp.eq.s32.totalorder %s27, 0
        // Predicated region
        $region37: #{tpu_custom_call.1} parent=27 // pred_check
          %p217 = pneg %p216
        $region38: #{tpu_custom_call.1} parent=27 // pred_check_branch
          %219 = sbr.rel (%p217) target = $region40
        $region39: #{tpu_custom_call.1} parent=27 // pred_region
          %220 = vst [vmem:[#allocation2] sm:$0xff] 0.0
          %221 = vst [vmem:[#allocation2 + $0x8] sm:$0xff] 0.0
          %222 = vst [vmem:[#allocation2 + $0x10] sm:$0xff] 0.0
        $region40: #{tpu_custom_call.1} parent=27 // pred_fallthru
          _
        %v223 = vld [vmem:[#allocation2] sm:$0xff]
        %v224 = vld [vmem:[#allocation2 + $0x8] sm:$0xff]
        %v225 = vld [vmem:[#allocation2 + $0x10] sm:$0xff]
        %v226 = vld [vmem:[#allocation3] sm:$0xff]
        %v227 = vld [vmem:[#allocation3 + $0x8] sm:$0xff]
        %v228 = vld [vmem:[#allocation3 + $0x10] sm:$0xff]
        %v229 = vld [vmem:[%s192] sm:$0xff]
        %v230 = vld [vmem:[%s192 + $0x8] sm:$0xff]
        %v231 = vld [vmem:[%s192 + $0x10] sm:$0xff]
        %v232 = vld [vmem:[%s192 + $0x18] sm:$0xff]
        %v233 = vld [vmem:[%s192 + $0x20] sm:$0xff]
        %v234 = vld [vmem:[%s192 + $0x28] sm:$0xff]
        %v235 = vld [vmem:[%s192 + $0x30] sm:$0xff]
        %v236 = vld [vmem:[%s192 + $0x38] sm:$0xff]
        %v237 = vld [vmem:[%s192 + $0x40] sm:$0xff]
        %v238 = vld [vmem:[%s192 + $0x48] sm:$0xff]
        %v239 = vld [vmem:[%s192 + $0x50] sm:$0xff]
        %v240 = vld [vmem:[%s192 + $0x58] sm:$0xff]
        %v241 = vld [vmem:[%s192 + $0x60] sm:$0xff]
        %v242 = vld [vmem:[%s192 + $0x68] sm:$0xff]
        %v243 = vld [vmem:[%s192 + $0x70] sm:$0xff]
        %v244 = vld [vmem:[%s192 + $0x78] sm:$0xff]
        %245 = vmatprep.subr.mxu0 0.0
        %246 = vmatpush1.msra.mxu0 %v229
        %247 = vmatprep.subr.mxu0 0.0
        %248 = vmatpush1.msra.mxu0 %v230
        %249 = vmatprep.subr.mxu0 0.0
        %250 = vmatpush1.msra.mxu0 %v231
        %251 = vmatprep.subr.mxu0 0.0
        %252 = vmatpush1.msra.mxu0 %v232
        %253 = vmatprep.subr.mxu0 0.0
        %254 = vmatpush1.msra.mxu0 %v233
        %255 = vmatprep.subr.mxu0 0.0
        %256 = vmatpush1.msra.mxu0 %v234
        %257 = vmatprep.subr.mxu0 0.0
        %258 = vmatpush1.msra.mxu0 %v235
        %259 = vmatprep.subr.mxu0 0.0
        %260 = vmatpush1.msra.mxu0 %v236
        %261 = vmatprep.subr.mxu0 0.0
        %262 = vmatpush1.msra.mxu0 %v237
        %263 = vmatprep.subr.mxu0 0.0
        %264 = vmatpush1.msra.mxu0 %v238
        %265 = vmatprep.subr.mxu0 0.0
        %266 = vmatpush1.msra.mxu0 %v239
        %267 = vmatprep.subr.mxu0 0.0
        %268 = vmatpush1.msra.mxu0 %v240
        %269 = vmatprep.subr.mxu0 0.0
        %270 = vmatpush1.msra.mxu0 %v241
        %271 = vmatprep.subr.mxu0 0.0
        %272 = vmatpush1.msra.mxu0 %v242
        %273 = vmatprep.subr.mxu0 0.0
        %274 = vmatpush1.msra.mxu0 %v243
        %275 = vmatprep.subr.mxu0 0.0
        %276 = vmatpush1.msra.mxu0 %v244
        %277 = vmatprep.subr.mxu0 0.0
        %278 = vmatpush1.msra.mxu0 0.0
        %279 = vmatprep.subr.mxu0 0.0
        %280 = vmatpush1.msra.mxu0 0.0
        %281 = vmatprep.subr.mxu0 0.0
        %282 = vmatpush1.msra.mxu0 0.0
        %283 = vmatprep.subr.mxu0 0.0
        %284 = vmatpush1.msra.mxu0 0.0
        %285 = vmatprep.subr.mxu0 0.0
        %286 = vmatpush1.msra.mxu0 0.0
        %287 = vmatprep.subr.mxu0 0.0
        %288 = vmatpush1.msra.mxu0 0.0
        %289 = vmatprep.subr.mxu0 0.0
        %290 = vmatpush1.msra.mxu0 0.0
        %291 = vmatprep.subr.mxu0 0.0
        %292 = vmatpush1.msra.mxu0 0.0
        %293 = vmatprep.subr.mxu0 0.0
        %294 = vmatpush1.msra.mxu0 0.0
        %295 = vmatprep.subr.mxu0 0.0
        %296 = vmatpush1.msra.mxu0 0.0
        %297 = vmatprep.subr.mxu0 0.0
        %298 = vmatpush1.msra.mxu0 0.0
        %299 = vmatprep.subr.mxu0 0.0
        %300 = vmatpush1.msra.mxu0 0.0
        %301 = vmatprep.subr.mxu0 0.0
        %302 = vmatpush1.msra.mxu0 0.0
        %303 = vmatprep.subr.mxu0 0.0
        %304 = vmatpush1.msra.mxu0 0.0
        %305 = vmatprep.subr.mxu0 0.0
        %306 = vmatpush1.msra.mxu0 0.0
        %307 = vmatprep.subr.mxu0 0.0
        %308 = vmatpush1.msra.mxu0 0.0
        %309 = vmatprep.mubr.f32.mxu0 0.0
        %310 = vmatmul.mubr.f32.gmra.mrb[0].mxu0 %v226
        %v311 = vpop.f32.mrb[0].mxu0
        %v312 = vadd.f32 0.0, %v311
        %v313 = vpop.f32.mrb[0].mxu0
        %314 = vmatprep.mubr.f32.mxu0 0.0
        %315 = vmatmul.mubr.f32.gmra.mrb[0].mxu0 %v227
        %v316 = vpop.f32.mrb[0].mxu0
        %v317 = vadd.f32 0.0, %v316
        %v318 = vpop.f32.mrb[0].mxu0
        %319 = vmatprep.mubr.f32.mxu0 0.0
        %320 = vmatmul.mubr.f32.gmra.mrb[0].mxu0 %v228
        %v321 = vpop.f32.mrb[0].mxu0
        %v322 = vadd.f32 0.0, %v321
        %v323 = vpop.f32.mrb[0].mxu0
        %324 = vdwg.mxu0
        %v325 = vadd.f32 %v223, %v312
        %v326 = vadd.f32 %v224, %v317
        %v327 = vadd.f32 %v225, %v322
        %328 = vst [vmem:[#allocation2] sm:$0xff] %v325
        %329 = vst [vmem:[#allocation2 + $0x8] sm:$0xff] %v326
        %330 = vst [vmem:[#allocation2 + $0x10] sm:$0xff] %v327
        // Predicated region
        $region41: #{tpu_custom_call.1} parent=27 // pred_check
          %p331 = pneg %p216
        $region42: #{tpu_custom_call.1} parent=27 // pred_check_branch
          %333 = sbr.rel (%p331) target = $region44
        $region43: #{tpu_custom_call.1} parent=27 // pred_region
          %v334 = vld [vmem:[#allocation2] sm:$0xff]
          %v335 = vld [vmem:[#allocation2 + $0x8] sm:$0xff]
          %v336 = vld [vmem:[#allocation2 + $0x10] sm:$0xff]
          %337 = vst [vmem:[%s212] sm:$0xff] %v334
          %338 = vst [vmem:[%s212 + $0x8] sm:$0xff] %v335
          %339 = vst [vmem:[%s212 + $0x10] sm:$0xff] %v336
        $region44: #{tpu_custom_call.1} parent=27 // pred_fallthru
          _
        %s340 = sand.u32 %s105, 1
        %s341 = scalar_lea.sflag [#allocation5], %s340
        %s342 = sand.u32 %s105, 1
        %s343 = smul.addr %s342, 24
        %s344 = scalar_lea.vmem [#allocation8], %s343
        // Predicated region
        $region45: #{tpu_custom_call.1} parent=27 // pred_check
          %p345 = pneg %p115
        $region46: #{tpu_custom_call.1} parent=27 // pred_check_branch
          %347 = sbr.rel (%p345) target = $region48
        $region47: #{tpu_custom_call.1} parent=27 // pred_region
          %s348 = smul.u32 3, %s26
          %s350 = ssub.s32 384, 384
          %351 = vsyncadd %s341, %s350
          %s352 = smul.addr %s25, 3
          %s353 = sadd.s32 %s348, %s352
          %s354 = smul.addr %s353, 128
          %s355 = scalar_lea.hbm %s2, %s354
          %s356 = sshll.u32 %s344, 4
          %s357 = int_to_ptr.vmem [resolvable:$true] %s356
          %362 = dma.vmem_to_hbm [thread:$0]  %s357, 384, %s355, %s341, 128, 128, 8
        $region48: #{tpu_custom_call.1} parent=27 // pred_fallthru
          _
      $region28: #{tpu_custom_call.1} parent=5 // pred_fallthru
        _
      %p363 = scmp.le.s32.totalorder 2, %s15
      // Predicated region
      $region49: #{tpu_custom_call.1} parent=5 // pred_check
        %p364 = pneg %p363
      $region50: #{tpu_custom_call.1} parent=5 // pred_check_branch
        %366 = sbr.rel (%p364) target = $region52
      $region51: #{tpu_custom_call.1} parent=5 // pred_region
        %s367 = ssub.s32 %s15, 2
        // Predicated region
        $region53: #{tpu_custom_call.1} parent=51 // pred_check
          %p368 = pneg %p121
        $region54: #{tpu_custom_call.1} parent=51 // pred_check_branch
          %370 = sbr.rel (%p368) target = $region56
        $region55: #{tpu_custom_call.1} parent=51 // pred_region
          %s371 = sand.u32 %s106, 1
          %s372 = scalar_lea.sflag [#allocation5], %s371
          %s373 = sand.u32 %s106, 1
          %s374 = smul.addr %s373, 24
          %s375 = scalar_lea.vmem [#allocation8], %s374
          %376 = dma.done %s372, 384
        $region56: #{tpu_custom_call.1} parent=51 // pred_fallthru
          _
      $region52: #{tpu_custom_call.1} parent=5 // pred_fallthru
        _
    $region6: #{tpu_custom_call.1} parent=1 // loop_footer
      %s19 = sadd.s32 1, %s15
    $region7: #{tpu_custom_call.1} parent=1 // loop_footer_branch
      %14 = sbr.rel target = $region3
    $region8: #{tpu_custom_call.1} parent=1 // loop_exit
      _
    %377 = vsyncpa [#allocation4], 1
    %s378 = scalar_lea.sflag [#allocation4], 1
    %379 = vsyncpa %s378, 1
    %380 = vsyncpa [#allocation7], 1
    %s381 = scalar_lea.sflag [#allocation7], 1
    %382 = vsyncpa %s381, 1
    %383 = vsyncpa [#allocation5], 1
    %s384 = scalar_lea.sflag [#allocation5], 1
    %385 = vsyncpa %s384, 1

</llo_original>
